<compile_context>
chip_gen: v5e
topology: v5e:2x2
jax: 0.10.0
libtpu: 0.0.40
codegen_flags: <defaults>
</compile_context>

<pallas_src>
import functools

import jax
import jax.numpy as jnp
from jax.experimental import pallas as pl
from jax.experimental.pallas import tpu as pltpu


# ---------------------------------------------------------------------------
# Shared tiny FC stack: mean (C,1) f32 -> sigmoid scale (C,1) f32.
# Uses only elementwise multiply + axis reductions (no matmul, no transpose).
#   w1t: (C, S) = fc1.weight.T     b1r: (1, S)
#   w2m: (C, S) = fc2.weight       b2c: (C, 1)
# ---------------------------------------------------------------------------
def _fc_stack(mean, w1t, b1r, w2m, b2c):
    z = jnp.sum(w1t * mean, axis=0, keepdims=True) + b1r        # (1, S)
    z = jnp.maximum(z, 0.0)
    s = jnp.sum(w2m * z, axis=1, keepdims=True) + b2c           # (C, 1)
    return jax.nn.sigmoid(s)


# ---------------------------------------------------------------------------
# Fused single-pass kernel: one (1, C, L) slab per grid step (grid over N).
# ---------------------------------------------------------------------------
def _fused_kernel(x_ref, w1t_ref, b1_ref, w2_ref, b2_ref, o_ref, *, inv_l):
    x = x_ref[0]                                                 # (C, L)
    mean = jnp.sum(x.astype(jnp.float32), axis=-1, keepdims=True) * inv_l
    s = _fc_stack(mean, w1t_ref[...], b1_ref[...], w2_ref[...], b2_ref[...])
    o_ref[0] = x * s.astype(x.dtype)


# ---------------------------------------------------------------------------
# Streaming fallback, phase 1: pooled sum over L tiles + FC epilogue.
# grid = (N, cdiv(L, l_tile)); (C,1) f32 accumulator lives in VMEM scratch.
# ---------------------------------------------------------------------------
def _pool_fc_kernel(x_ref, w1t_ref, b1_ref, w2_ref, b2_ref, s_ref, acc_ref, *,
                    inv_l, l_total, l_tile, needs_mask):
    l = pl.program_id(1)

    @pl.when(l == 0)
    def _():
        acc_ref[...] = jnp.zeros_like(acc_ref)

    xf = x_ref[0].astype(jnp.float32)                            # (C, l_tile)
    if needs_mask:
        lane = jax.lax.broadcasted_iota(jnp.int32, xf.shape, 1)
        xf = jnp.where(lane < (l_total - l * l_tile), xf, 0.0)
    acc_ref[...] += jnp.sum(xf, axis=-1, keepdims=True)

    @pl.when(l == pl.num_programs(1) - 1)
    def _():
        mean = acc_ref[...] * inv_l
        s = _fc_stack(mean, w1t_ref[...], b1_ref[...], w2_ref[...], b2_ref[...])
        s_ref[0] = s.astype(s_ref.dtype)


# ---------------------------------------------------------------------------
# Streaming fallback, phase 2: excite (multiply by precomputed scale).
# Scale is already in x.dtype -> no per-step cast; OOB tail of the boundary
# block is clipped on writeback, so no mask is needed here.
# ---------------------------------------------------------------------------
def _excite_kernel(x_ref, s_ref, o_ref):
    o_ref[0] = x_ref[0] * s_ref[0]


# ---------------------------------------------------------------------------
# Tiling helpers.
# ---------------------------------------------------------------------------
def _padded_slab_bytes(c, l, itemsize):
    sub = max(8, 32 // itemsize)                 # sublane pack for dtype
    c_pad = ((c + sub - 1) // sub) * sub
    l_pad = ((l + 127) // 128) * 128
    return c_pad * l_pad * itemsize


def _choose_l_tile(L, C, itemsize, target_bytes):
    """Lane-dense (multiple-of-128) L tile targeting `target_bytes` per
    (C, tile) block.  Returns full L when the whole extent fits (a full-dim
    block is always legal, even unaligned); otherwise a 128-multiple tile for
    a cdiv grid (tail handled by masking / writeback clipping)."""
    sub = max(8, 32 // itemsize)
    c_pad = ((C + sub - 1) // sub) * sub
    lanes = (target_bytes // max(1, c_pad * itemsize)) // 128 * 128
    lanes = max(128, lanes)
    if lanes >= L:
        return L
    return lanes


# ---------------------------------------------------------------------------
# Public wrapper.
# ---------------------------------------------------------------------------
def squeeze_excitation_1d(x, w1, b1, w2, b2, *,
                          fused_slab_budget_bytes=36 * 1024 * 1024,
                          stream_block_bytes=4 * 1024 * 1024,
                          vmem_limit_bytes=48 * 1024 * 1024):
    """x: (N, C, L); w1: (S, C); b1: (S,); w2: (C, S); b2: (C,)."""
    N, C, L = x.shape
    S = w1.shape[0]
    itemsize = jnp.dtype(x.dtype).itemsize
    inv_l = 1.0 / float(L)

    # Weight prep (off the hot path): fc1 weight transposed to (C, S) so both
    # FC contractions become broadcast-multiply + axis reductions in-kernel.
    w1t = jnp.asarray(w1, jnp.float32).T.reshape(C, S)
    b1r = jnp.asarray(b1, jnp.float32).reshape(1, S)
    w2m = jnp.asarray(w2, jnp.float32).reshape(C, S)
    b2c = jnp.asarray(b2, jnp.float32).reshape(C, 1)

    weight_specs = [
        pl.BlockSpec((C, S), lambda *a: (0, 0)),
        pl.BlockSpec((1, S), lambda *a: (0, 0)),
        pl.BlockSpec((C, S), lambda *a: (0, 0)),
        pl.BlockSpec((C, 1), lambda *a: (0, 0)),
    ]

    # ---------------- Fused single-pass path -------------------------------
    slab = _padded_slab_bytes(C, L, itemsize)
    if 4 * slab <= fused_slab_budget_bytes:      # in+out, double-buffered
        return pl.pallas_call(
            functools.partial(_fused_kernel, inv_l=inv_l),
            out_shape=jax.ShapeDtypeStruct((N, C, L), x.dtype),
            grid=(N,),
            in_specs=[pl.BlockSpec((1, C, L), lambda n: (n, 0, 0))] + weight_specs,
            out_specs=pl.BlockSpec((1, C, L), lambda n: (n, 0, 0)),
            compiler_params=pltpu.CompilerParams(
                dimension_semantics=("parallel",),
                vmem_limit_bytes=vmem_limit_bytes),
        )(x, w1t, b1r, w2m, b2c)

    # ---------------- Streaming fallback -----------------------------------
    # Phase 1: pooled sums + FC epilogue -> per-batch scale (N, C, 1), x.dtype.
    # Pool streams only one big array, so it gets a 2x larger tile budget.
    lt1 = _choose_l_tile(L, C, itemsize, 2 * stream_block_bytes)
    nl1 = pl.cdiv(L, lt1)
    scale = pl.pallas_call(
        functools.partial(_pool_fc_kernel, inv_l=inv_l, l_total=L, l_tile=lt1,
                          needs_mask=(L % lt1 != 0)),
        out_shape=jax.ShapeDtypeStruct((N, C, 1), x.dtype),
        grid=(N, nl1),
        in_specs=[pl.BlockSpec((1, C, lt1), lambda n, l: (n, 0, l))] + weight_specs,
        out_specs=pl.BlockSpec((1, C, 1), lambda n, l: (n, 0, 0)),
        scratch_shapes=[pltpu.VMEM((C, 1), jnp.float32)],
        compiler_params=pltpu.CompilerParams(
            dimension_semantics=("parallel", "arbitrary"),
            vmem_limit_bytes=vmem_limit_bytes),
    )(x, w1t, b1r, w2m, b2c)

    # Phase 2: excite (both axes parallel; scale fetched once per batch).
    lt2 = _choose_l_tile(L, C, itemsize, stream_block_bytes)
    nl2 = pl.cdiv(L, lt2)
    return pl.pallas_call(
        _excite_kernel,
        out_shape=jax.ShapeDtypeStruct((N, C, L), x.dtype),
        grid=(N, nl2),
        in_specs=[
            pl.BlockSpec((1, C, lt2), lambda n, l: (n, 0, l)),
            pl.BlockSpec((1, C, 1), lambda n, l: (n, 0, 0)),
        ],
        out_specs=pl.BlockSpec((1, C, lt2), lambda n, l: (n, 0, l)),
        compiler_params=pltpu.CompilerParams(
            dimension_semantics=("parallel", "parallel"),
            vmem_limit_bytes=vmem_limit_bytes),
    )(x, scale)


# ---------------------------------------------------------------------------
# Pure-JAX reference mirroring the PyTorch forward.
# ---------------------------------------------------------------------------
def se1d_reference(x, w1, b1, w2, b2):
    pooled = jnp.mean(x.astype(jnp.float32), axis=-1, keepdims=True)   # (N, C, 1)
    z = jnp.einsum('sc,ncx->nsx', w1, pooled) + b1[None, :, None]      # (N, S, 1)
    z = jnp.maximum(z, 0.0)
    s = jnp.einsum('cs,nsx->ncx', w2, z) + b2[None, :, None]           # (N, C, 1)
    s = jax.nn.sigmoid(s)
    return (s * x.astype(jnp.float32)).astype(x.dtype)


def _make_params(key, C, S):
    k1, k2, k3, k4 = jax.random.split(key, 4)
    w1 = 0.1 * jax.random.normal(k1, (S, C), dtype=jnp.float32)
    b1 = 0.1 * jax.random.normal(k2, (S,), dtype=jnp.float32)
    w2 = 0.1 * jax.random.normal(k3, (C, S), dtype=jnp.float32)
    b2 = 0.1 * jax.random.normal(k4, (C,), dtype=jnp.float32)
    return w1, b1, w2, b2


if __name__ == "__main__":
    key = jax.random.PRNGKey(0)

    # --- Case 1: module-consistent small shapes (fused single-pass path) ----
    N, C, L, S = 2, 4, 16, 2
    kx, kp = jax.random.split(key)
    x = jax.random.normal(kx, (N, C, L), dtype=jnp.float32)
    w1, b1, w2, b2 = _make_params(kp, C, S)
    out = jax.block_until_ready(squeeze_excitation_1d(x, w1, b1, w2, b2))
    ref = se1d_reference(x, w1, b1, w2, b2)
    assert out.shape == (N, C, L)
    assert jnp.allclose(out, ref, atol=1e-3, rtol=1e-3), "mismatch (fused f32)"

    # --- Case 2: force the streaming fallback + non-128-aligned L tail ------
    N2, C2, L2, S2 = 2, 8, 600, 4
    kx2, kp2 = jax.random.split(jax.random.PRNGKey(1))
    x2 = jax.random.normal(kx2, (N2, C2, L2), dtype=jnp.float32)
    w1b, b1b, w2b, b2b = _make_params(kp2, C2, S2)
    out2 = jax.block_until_ready(
        squeeze_excitation_1d(x2, w1b, b1b, w2b, b2b,
                              fused_slab_budget_bytes=1024,   # force fallback
                              stream_block_bytes=4096))       # force multi-tile
    ref2 = se1d_reference(x2, w1b, b1b, w2b, b2b)
    assert out2.shape == (N2, C2, L2)
    assert jnp.allclose(out2, ref2, atol=1e-3, rtol=1e-3), "mismatch (streaming f32)"

    # --- Case 3: bf16 input on the fused path (looser tolerance) ------------
    x3 = jax.random.normal(jax.random.PRNGKey(2), (2, 4, 128), dtype=jnp.bfloat16)
    w1c, b1c, w2c, b2c = _make_params(jax.random.PRNGKey(3), 4, 2)
    out3 = jax.block_until_ready(squeeze_excitation_1d(x3, w1c, b1c, w2c, b2c))
    ref3 = se1d_reference(x3, w1c, b1c, w2c, b2c)
    assert jnp.allclose(out3.astype(jnp.float32), ref3.astype(jnp.float32),
                        atol=2e-2, rtol=2e-2), "mismatch (fused bf16)"

    print("KERNEL_OK")
</pallas_src>

<mosaic_0001>
module attributes {stable_mosaic.version = 11 : i64} {
  func.func @_fused_kernel(%arg0: i32, %arg1: memref<1x4x16xf32, #tpu.memory_space<vmem>>, %arg2: memref<4x2xf32, #tpu.memory_space<vmem>>, %arg3: memref<1x2xf32, #tpu.memory_space<vmem>>, %arg4: memref<4x2xf32, #tpu.memory_space<vmem>>, %arg5: memref<4x1xf32, #tpu.memory_space<vmem>>, %arg6: memref<1x4x16xf32, #tpu.memory_space<vmem>>) attributes {dimension_semantics = [#tpu.dimension_semantics<parallel>], iteration_bounds = array<i64: 2>, scalar_prefetch = 0 : i64, scratch_operands = 0 : i64, tpu.core_type = #tpu.core_type<tc>, window_params = [{transform_indices = @transform_0, window_bounds = array<i64: 1, 4, 16>}, {pipeline_mode = #tpu.pipeline_mode<synchronous>, transform_indices = @transform_1, window_bounds = array<i64: 4, 2>}, {pipeline_mode = #tpu.pipeline_mode<synchronous>, transform_indices = @transform_2, window_bounds = array<i64: 1, 2>}, {pipeline_mode = #tpu.pipeline_mode<synchronous>, transform_indices = @transform_3, window_bounds = array<i64: 4, 2>}, {pipeline_mode = #tpu.pipeline_mode<synchronous>, transform_indices = @transform_4, window_bounds = array<i64: 4, 1>}, {transform_indices = @transform_5, window_bounds = array<i64: 1, 4, 16>}]} {
    %c0 = arith.constant 0 : index
    %c0_0 = arith.constant 0 : index
    %c0_1 = arith.constant 0 : index
    %0 = vector.load %arg1[%c0, %c0_0, %c0_1] : memref<1x4x16xf32, #tpu.memory_space<vmem>>, vector<1x4x16xf32>
    %1 = vector.shape_cast %0 : vector<1x4x16xf32> to vector<4x16xf32>
    %cst = arith.constant dense<0.000000e+00> : vector<4xf32>
    %2 = vector.multi_reduction <add>, %1, %cst [1] : vector<4x16xf32> to vector<4xf32>
    %3 = vector.shape_cast %2 : vector<4xf32> to vector<4x1xf32>
    %cst_2 = arith.constant 6.250000e-02 : f32
    %4 = vector.broadcast %cst_2 : f32 to vector<4x1xf32>
    %5 = arith.mulf %3, %4 : vector<4x1xf32>
    %c0_3 = arith.constant 0 : index
    %c0_4 = arith.constant 0 : index
    %6 = vector.load %arg2[%c0_3, %c0_4] : memref<4x2xf32, #tpu.memory_space<vmem>>, vector<4x2xf32>
    %c0_5 = arith.constant 0 : index
    %c0_6 = arith.constant 0 : index
    %7 = vector.load %arg3[%c0_5, %c0_6] : memref<1x2xf32, #tpu.memory_space<vmem>>, vector<1x2xf32>
    %c0_7 = arith.constant 0 : index
    %c0_8 = arith.constant 0 : index
    %8 = vector.load %arg4[%c0_7, %c0_8] : memref<4x2xf32, #tpu.memory_space<vmem>>, vector<4x2xf32>
    %c0_9 = arith.constant 0 : index
    %c0_10 = arith.constant 0 : index
    %9 = vector.load %arg5[%c0_9, %c0_10] : memref<4x1xf32, #tpu.memory_space<vmem>>, vector<4x1xf32>
    %10 = vector.broadcast %5 : vector<4x1xf32> to vector<4x2xf32>
    %11 = arith.mulf %6, %10 : vector<4x2xf32>
    %cst_11 = arith.constant dense<0.000000e+00> : vector<2xf32>
    %12 = vector.multi_reduction <add>, %11, %cst_11 [0] : vector<4x2xf32> to vector<2xf32>
    %13 = vector.shape_cast %12 : vector<2xf32> to vector<1x2xf32>
    %14 = arith.addf %13, %7 : vector<1x2xf32>
    %cst_12 = arith.constant 0.000000e+00 : f32
    %15 = vector.broadcast %cst_12 : f32 to vector<1x2xf32>
    %16 = arith.maximumf %14, %15 : vector<1x2xf32>
    %17 = vector.broadcast %16 : vector<1x2xf32> to vector<4x2xf32>
    %18 = arith.mulf %8, %17 : vector<4x2xf32>
    %cst_13 = arith.constant dense<0.000000e+00> : vector<4xf32>
    %19 = vector.multi_reduction <add>, %18, %cst_13 [1] : vector<4x2xf32> to vector<4xf32>
    %20 = vector.shape_cast %19 : vector<4xf32> to vector<4x1xf32>
    %21 = arith.addf %20, %9 : vector<4x1xf32>
    %22 = arith.negf %21 : vector<4x1xf32>
    %23 = math.exp %22 : vector<4x1xf32>
    %cst_14 = arith.constant 1.000000e+00 : f32
    %24 = vector.broadcast %cst_14 : f32 to vector<4x1xf32>
    %25 = arith.addf %24, %23 : vector<4x1xf32>
    %26 = arith.divf %24, %25 : vector<4x1xf32>
    %27 = vector.broadcast %26 : vector<4x1xf32> to vector<4x16xf32>
    %28 = arith.mulf %1, %27 : vector<4x16xf32>
    %c0_15 = arith.constant 0 : index
    %c0_16 = arith.constant 0 : index
    %c0_17 = arith.constant 0 : index
    %29 = vector.load %arg6[%c0_15, %c0_16, %c0_17] : memref<1x4x16xf32, #tpu.memory_space<vmem>>, vector<1x4x16xf32>
    %30 = vector.shape_cast %29 : vector<1x4x16xf32> to vector<4x16xf32>
    %31 = vector.shape_cast %28 : vector<4x16xf32> to vector<1x4x16xf32>
    tpu.vector_store %arg6[%c0_15, %c0_16, %c0_17], %31 {strides = array<i32>} : memref<1x4x16xf32, #tpu.memory_space<vmem>>, vector<1x4x16xf32>,
    return
  }
  func.func @transform_0(%arg0: i32) -> (i32, i32, i32) {
    %c0_i32 = arith.constant 0 : i32
    %c0_i32_0 = arith.constant 0 : i32
    %c0_i32_1 = arith.constant 0 : i32
    return %arg0, %c0_i32, %c0_i32_0 : i32, i32, i32
  }
  func.func @transform_1(%arg0: i32) -> (i32, i32) {
    %c0_i32 = arith.constant 0 : i32
    %c0_i32_0 = arith.constant 0 : i32
    %c0_i32_1 = arith.constant 0 : i32
    return %c0_i32, %c0_i32_0 : i32, i32
  }
  func.func @transform_2(%arg0: i32) -> (i32, i32) {
    %c0_i32 = arith.constant 0 : i32
    %c0_i32_0 = arith.constant 0 : i32
    %c0_i32_1 = arith.constant 0 : i32
    return %c0_i32, %c0_i32_0 : i32, i32
  }
  func.func @transform_3(%arg0: i32) -> (i32, i32) {
    %c0_i32 = arith.constant 0 : i32
    %c0_i32_0 = arith.constant 0 : i32
    %c0_i32_1 = arith.constant 0 : i32
    return %c0_i32, %c0_i32_0 : i32, i32
  }
  func.func @transform_4(%arg0: i32) -> (i32, i32) {
    %c0_i32 = arith.constant 0 : i32
    %c0_i32_0 = arith.constant 0 : i32
    %c0_i32_1 = arith.constant 0 : i32
    return %c0_i32, %c0_i32_0 : i32, i32
  }
  func.func @transform_5(%arg0: i32) -> (i32, i32, i32) {
    %c0_i32 = arith.constant 0 : i32
    %c0_i32_0 = arith.constant 0 : i32
    %c0_i32_1 = arith.constant 0 : i32
    return %arg0, %c0_i32, %c0_i32_0 : i32, i32, i32
  }
}

</mosaic_0001>

<llo_original>
// kernel: tpu_custom_call.1
$region0: #{tpu_custom_call.1}
  #allocation0 [shape = 'u32[]', space=smem, size = 0x4, offset = 0x4, fixed_abs, tag = 'smem constant byte address 0x4 - core index']
  #allocation1 [shape = 'u32[72,128]{1,0:T(1,128)}', space=vmem, size = 0x9000, scoped, tag = 'internal scratch']
  %s0 = inlined_call_operand.vmem [shape: f32[2,4,16], index: 0, kind: input, shape index: {}]
  %s1 = inlined_call_operand.vmem [shape: f32[4,2], index: 1, kind: input, shape index: {}]
  %s2 = inlined_call_operand.vmem [shape: f32[1,2], index: 2, kind: input, shape index: {}]
  %s3 = inlined_call_operand.vmem [shape: f32[4,2], index: 3, kind: input, shape index: {}]
  %s4 = inlined_call_operand.vmem [shape: f32[4,1], index: 4, kind: input, shape index: {}]
  %s5 = inlined_call_operand.hbm [shape: f32[2,4,16], index: 5, kind: output, shape index: {}]
  %s6 = sld [smem:[#allocation0]]
  $region53: #{tpu_custom_call.1} parent=0
    _
  %s8 = ssub.s32 1, %s6
  %s9 = scalar_select 0, %s8, %s6
  $region1: #{tpu_custom_call.1} parent=0
    #allocation2 [shape = 'u8[4096]{0}', space=vmem, size = 0x1000, scoped, tag = 'output window, operand 0']
    #allocation3 [shape = 's32[2]{0}', space=sflag, size = 0x8, scoped, tag = 'scoped memory for tpu_custom_call.1']
    %10 = vsyncpa [#allocation3], 0
    %s11 = scalar_lea.sflag [#allocation3], 1
    %12 = vsyncpa %s11, 0
    loop: start=0, step=1, limit=4
    $region2: #{tpu_custom_call.1} parent=1 // loop_pre_header
      _
    $region3: #{tpu_custom_call.1} parent=1 // loop_header
      %s14 = sphi 0, %s18
      %p15 = scmp.ge.s32.totalorder %s14, 4
      %s24 = sphi 0, %s26
      %s27 = sphi 0, %s24
      %s28 = sphi 0, %s27
      %s44 = sphi 0, %s28
      %s48 = sphi 0, %s48
      %s50 = sphi 0, %s48
      %s51 = sphi 0, %s50
      %s65 = sphi 0, %s51
      %s69 = sphi 0, %s69
      %s71 = sphi 0, %s69
      %s72 = sphi 0, %s71
      %s86 = sphi 0, %s72
      %s90 = sphi 0, %s90
      %s92 = sphi 0, %s90
      %s93 = sphi 0, %s92
      %s107 = sphi 0, %s93
      %s111 = sphi 0, %s111
      %s113 = sphi 0, %s111
      %s114 = sphi 0, %s113
      %s128 = sphi 0, %s114
      %s134 = sphi 0, %s136
      %s137 = sphi 0, %s134
      %s138 = sphi 0, %s137
      %s154 = sphi 0, %s138
    $region4: #{tpu_custom_call.1} parent=1 // loop_header_branch
      %17 = sbr.rel (%p15) target = $region8
    $region5: #{tpu_custom_call.1} parent=1 // loop_body
      %s19 = ssub.s32 %s14, 1
      %s20 = ssub.s32 %s14, 2
      %s21 = sadd.s32 %s14, 1
      %s22 = ssub.s32 %s14, %s21
      %p23 = scmp.eq.s32.totalorder %s22, 0
      %s25 = sadd.s32 %s24, 1
      %s26 = scalar_select %p23, %s24, %s25
      %p29 = pneg %p23
      %p30 = scmp.eq.s32.totalorder %s14, 1
      %p31 = por %p29, %p30
      %p32 = scmp.ne.s32.totalorder %s24, %s27
      %p33 = scmp.eq.s32.totalorder %s14, 0
      %p34 = por %p32, %p33
      %p35 = scmp.ne.s32.totalorder %s24, %s27
      %p36 = scmp.eq.s32.totalorder %s19, 1
      %p37 = por %p35, %p36
      %p38 = scmp.ne.s32.totalorder %s27, %s28
      %p39 = scmp.eq.s32.totalorder %s19, 0
      %p40 = por %p38, %p39
      %p41 = scmp.ne.s32.totalorder %s27, %s28
      %p42 = scmp.eq.s32.totalorder %s20, 1
      %p43 = por %p41, %p42
      %p45 = scmp.ne.s32.totalorder %s28, %s44
      %p46 = scmp.eq.s32.totalorder %s20, 0
      %p47 = por %p45, %p46
      %s49 = sadd.s32 %s48, 1
      %p52 = scmp.eq.s32.totalorder %s14, 1
      %p53 = scmp.ne.s32.totalorder %s48, %s50
      %p54 = scmp.eq.s32.totalorder %s14, 0
      %p55 = por %p53, %p54
      %p56 = scmp.ne.s32.totalorder %s48, %s50
      %p57 = scmp.eq.s32.totalorder %s19, 1
      %p58 = por %p56, %p57
      %p59 = scmp.ne.s32.totalorder %s50, %s51
      %p60 = scmp.eq.s32.totalorder %s19, 0
      %p61 = por %p59, %p60
      %p62 = scmp.ne.s32.totalorder %s50, %s51
      %p63 = scmp.eq.s32.totalorder %s20, 1
      %p64 = por %p62, %p63
      %p66 = scmp.ne.s32.totalorder %s51, %s65
      %p67 = scmp.eq.s32.totalorder %s20, 0
      %p68 = por %p66, %p67
      %s70 = sadd.s32 %s69, 1
      %p73 = scmp.eq.s32.totalorder %s14, 1
      %p74 = scmp.ne.s32.totalorder %s69, %s71
      %p75 = scmp.eq.s32.totalorder %s14, 0
      %p76 = por %p74, %p75
      %p77 = scmp.ne.s32.totalorder %s69, %s71
      %p78 = scmp.eq.s32.totalorder %s19, 1
      %p79 = por %p77, %p78
      %p80 = scmp.ne.s32.totalorder %s71, %s72
      %p81 = scmp.eq.s32.totalorder %s19, 0
      %p82 = por %p80, %p81
      %p83 = scmp.ne.s32.totalorder %s71, %s72
      %p84 = scmp.eq.s32.totalorder %s20, 1
      %p85 = por %p83, %p84
      %p87 = scmp.ne.s32.totalorder %s72, %s86
      %p88 = scmp.eq.s32.totalorder %s20, 0
      %p89 = por %p87, %p88
      %s91 = sadd.s32 %s90, 1
      %p94 = scmp.eq.s32.totalorder %s14, 1
      %p95 = scmp.ne.s32.totalorder %s90, %s92
      %p96 = scmp.eq.s32.totalorder %s14, 0
      %p97 = por %p95, %p96
      %p98 = scmp.ne.s32.totalorder %s90, %s92
      %p99 = scmp.eq.s32.totalorder %s19, 1
      %p100 = por %p98, %p99
      %p101 = scmp.ne.s32.totalorder %s92, %s93
      %p102 = scmp.eq.s32.totalorder %s19, 0
      %p103 = por %p101, %p102
      %p104 = scmp.ne.s32.totalorder %s92, %s93
      %p105 = scmp.eq.s32.totalorder %s20, 1
      %p106 = por %p104, %p105
      %p108 = scmp.ne.s32.totalorder %s93, %s107
      %p109 = scmp.eq.s32.totalorder %s20, 0
      %p110 = por %p108, %p109
      %s112 = sadd.s32 %s111, 1
      %p115 = scmp.eq.s32.totalorder %s14, 1
      %p116 = scmp.ne.s32.totalorder %s111, %s113
      %p117 = scmp.eq.s32.totalorder %s14, 0
      %p118 = por %p116, %p117
      %p119 = scmp.ne.s32.totalorder %s111, %s113
      %p120 = scmp.eq.s32.totalorder %s19, 1
      %p121 = por %p119, %p120
      %p122 = scmp.ne.s32.totalorder %s113, %s114
      %p123 = scmp.eq.s32.totalorder %s19, 0
      %p124 = por %p122, %p123
      %p125 = scmp.ne.s32.totalorder %s113, %s114
      %p126 = scmp.eq.s32.totalorder %s20, 1
      %p127 = por %p125, %p126
      %p129 = scmp.ne.s32.totalorder %s114, %s128
      %p130 = scmp.eq.s32.totalorder %s20, 0
      %p131 = por %p129, %p130
      %s132 = ssub.s32 %s14, %s21
      %p133 = scmp.eq.s32.totalorder %s132, 0
      %s135 = sadd.s32 %s134, 1
      %s136 = scalar_select %p133, %s134, %s135
      %p139 = pneg %p133
      %p140 = scmp.eq.s32.totalorder %s14, 1
      %p141 = por %p139, %p140
      %p142 = scmp.ne.s32.totalorder %s134, %s137
      %p143 = scmp.eq.s32.totalorder %s14, 0
      %p144 = por %p142, %p143
      %p145 = scmp.ne.s32.totalorder %s134, %s137
      %p146 = scmp.eq.s32.totalorder %s19, 1
      %p147 = por %p145, %p146
      %p148 = scmp.ne.s32.totalorder %s137, %s138
      %p149 = scmp.eq.s32.totalorder %s19, 0
      %p150 = por %p148, %p149
      %p151 = scmp.ne.s32.totalorder %s137, %s138
      %p152 = scmp.eq.s32.totalorder %s20, 1
      %p153 = por %p151, %p152
      %p155 = scmp.ne.s32.totalorder %s138, %s154
      %p156 = scmp.eq.s32.totalorder %s20, 0
      %p157 = por %p155, %p156
      %p158 = scmp.le.s32.totalorder 1, %s14
      %p159 = scmp.lt.s32.totalorder %s14, 3
      %p160 = pnand %p158, %p159
      %p161 = pneg %p160
      // Predicated region
      $region9: #{tpu_custom_call.1} parent=5 // pred_check
        _
      $region10: #{tpu_custom_call.1} parent=5 // pred_check_branch
        %163 = sbr.rel (%p160) target = $region12
      $region11: #{tpu_custom_call.1} parent=5 // pred_region
        %s164 = ssub.s32 %s14, 1
        // Predicated region
        $region13: #{tpu_custom_call.1} parent=11 // pred_check
          %p165 = pneg %p61
        $region14: #{tpu_custom_call.1} parent=11 // pred_check_branch
          %167 = sbr.rel (%p165) target = $region16
        $region15: #{tpu_custom_call.1} parent=11 // pred_region
          _
        $region16: #{tpu_custom_call.1} parent=11 // pred_fallthru
          _
        // Predicated region
        $region17: #{tpu_custom_call.1} parent=11 // pred_check
          %p168 = pneg %p82
        $region18: #{tpu_custom_call.1} parent=11 // pred_check_branch
          %170 = sbr.rel (%p168) target = $region20
        $region19: #{tpu_custom_call.1} parent=11 // pred_region
          _
        $region20: #{tpu_custom_call.1} parent=11 // pred_fallthru
          _
        // Predicated region
        $region21: #{tpu_custom_call.1} parent=11 // pred_check
          %p171 = pneg %p103
        $region22: #{tpu_custom_call.1} parent=11 // pred_check_branch
          %173 = sbr.rel (%p171) target = $region24
        $region23: #{tpu_custom_call.1} parent=11 // pred_region
          _
        $region24: #{tpu_custom_call.1} parent=11 // pred_fallthru
          _
        // Predicated region
        $region25: #{tpu_custom_call.1} parent=11 // pred_check
          %p174 = pneg %p124
        $region26: #{tpu_custom_call.1} parent=11 // pred_check_branch
          %176 = sbr.rel (%p174) target = $region28
        $region27: #{tpu_custom_call.1} parent=11 // pred_region
          _
        $region28: #{tpu_custom_call.1} parent=11 // pred_fallthru
          _
      $region12: #{tpu_custom_call.1} parent=5 // pred_fallthru
        _
      %p177 = scmp.lt.s32.totalorder %s14, 2
      // Predicated region
      $region29: #{tpu_custom_call.1} parent=5 // pred_check
        %p178 = pneg %p177
      $region30: #{tpu_custom_call.1} parent=5 // pred_check_branch
        %180 = sbr.rel (%p178) target = $region32
      $region31: #{tpu_custom_call.1} parent=5 // pred_region
        // Predicated region
        $region33: #{tpu_custom_call.1} parent=31 // pred_check
          %p181 = pneg %p34
        $region34: #{tpu_custom_call.1} parent=31 // pred_check_branch
          %183 = sbr.rel (%p181) target = $region36
        $region35: #{tpu_custom_call.1} parent=31 // pred_region
          %p184 = scmp.lt.s32.totalorder %s14, 1
          %s185 = scalar_select %p184, %s14, 1
          %s186 = smul.addr %s185, 4
          %s187 = scalar_lea.vmem %s0, %s186
        $region36: #{tpu_custom_call.1} parent=31 // pred_fallthru
          _
      $region32: #{tpu_custom_call.1} parent=5 // pred_fallthru
        _
      %p188 = scmp.le.s32.totalorder 1, %s14
      %p189 = scmp.lt.s32.totalorder %s14, 3
      %p190 = pnand %p188, %p189
      %p191 = pneg %p190
      // Predicated region
      $region37: #{tpu_custom_call.1} parent=5 // pred_check
        _
      $region38: #{tpu_custom_call.1} parent=5 // pred_check_branch
        %193 = sbr.rel (%p190) target = $region40
      $region39: #{tpu_custom_call.1} parent=5 // pred_region
        %s194 = ssub.s32 %s14, 1
        %p195 = scmp.lt.s32.totalorder %s19, 1
        %s196 = scalar_select %p195, %s19, 1
        %s197 = smul.addr %s196, 4
        %s198 = scalar_lea.vmem %s0, %s197
        %p199 = pneg %p40
        %p200 = pneg %p37
        %p201 = pneg %p61
        %p202 = pneg %p58
        %p203 = pneg %p82
        %p204 = pneg %p79
        %p205 = pneg %p103
        %p206 = pneg %p100
        %p207 = pneg %p124
        %p208 = pneg %p121
        %p209 = pneg %p150
        %p210 = pneg %p147
        %s211 = sand.u32 %s137, 1
        %s212 = scalar_lea.sflag [#allocation3], %s211
        %s213 = sand.u32 %s137, 1
        %s214 = smul.addr %s213, 4
        %s215 = scalar_lea.vmem [#allocation2], %s214
        %p216 = scmp.lt.s32.totalorder %s19, 1
        %s217 = scalar_select %p216, %s19, 1
        %s218 = smul.addr %s217, 4
        %s219 = scalar_lea.vmem %s0, %s218
        %v220 = vld [vmem:[%s219] sm:$0xf]
        %vm221 = vcmask 125952
        %v222 = vsel %vm221, %v220, 0.0
        %223 = vadd.xlane.f32.xlu0 %v222
        %v224 = vpop.xlane.xlu0 %223
        %v225 = vmul.f32 %v224, 0.0625
        %v226 = vld [vmem:[%s1] sm:$0xf]
        %v227 = vld [vmem:[%s2] sm:$0x1]
        %v228 = vld [vmem:[%s3] sm:$0xf]
        %v229 = vld [vmem:[%s4] sm:$0xf]
        %v230 = vmul.f32 %v226, %v225
        %vm231 = vcmask 11264
        %v232 = vsel %vm231, %v230, 0.0
        %v233 = vrot.slane %v232, 4
        %v234 = vadd.f32 %v232, %v233
        %v235 = vrot.slane %v234, 2
        %v236 = vadd.f32 %v234, %v235
        %v237 = vrot.slane %v236, 1
        %v238 = vadd.f32 %v236, %v237
        %v239 = vadd.f32 %v238, %v227
        %v240 = vmax.f32 %v239, 0.0
        %v241 = vperm.slane %v240, 0
        %v242 = vmul.f32 %v228, %v241
        %v243 = vsel %vm231, %v242, 0.0
        %244 = vadd.xlane.f32.xlu0 %v243
        %v245 = vpop.xlane.xlu0 %244
        %v246 = vadd.f32 %v245, %v229
        %v247 = vxor.u32 %v246, 2147483648
        %v248 = vmul.f32 %v247, 1.442695
        %v249 = vpow.pop %v248
        %v250 = vadd.f32 %v249, 1.0
        %v251 = vrcp.pop %v250
        %v252 = vmul.f32 %v250, %v251
        %v253 = vsub.f32 1.0, %v252
        %v254 = vmul.f32 %v251, %v253
        %v255 = vadd.f32 %v251, %v254
        %vm256 = vweird.f32 %v250
        %vm257 = vweird.f32 %v251
        %vm258 = vmor %vm256, %vm257
        %v259 = vsel %vm258, %v251, %v255
        %v260 = vand.u32 2147483647, %v250
        %vm261 = vcmp.eq.f32.partialorder %v260, 8.507059e+37
        %v262 = vand.u32 %v250, 2147483648
        %v263 = vor.u32 1.1754944e-38, %v262
        %v264 = vsel %vm261, %v263, %v259
        %v265 = vmul.f32 1.0, %v264
        %267 = vset.pattern.permute.xlu0 0
        %268 = vperm.xlu0 %267, %v265
        %v269 = vpop.permute.xlu0 %268
        %v271 = vmul.f32 %v220, %v269
        %272 = vst.msk [vmem:[%s215] sm:$0xf] %vm221, %v271
        %s273 = sand.u32 %s137, 1
        %s274 = scalar_lea.sflag [#allocation3], %s273
        %s275 = sand.u32 %s137, 1
        %s276 = smul.addr %s275, 4
        %s277 = scalar_lea.vmem [#allocation2], %s276
        // Predicated region
        $region41: #{tpu_custom_call.1} parent=39 // pred_check
          %p278 = pneg %p147
        $region42: #{tpu_custom_call.1} parent=39 // pred_check_branch
          %280 = sbr.rel (%p278) target = $region44
        $region43: #{tpu_custom_call.1} parent=39 // pred_region
          %282 = vsyncadd %s274, 0
          %s283 = smul.addr %s19, 4
          %s284 = scalar_lea.hbm %s5, %s283
          %s286 = sshll.u32 %s277, 4
          %s287 = int_to_ptr.vmem [resolvable:$true] %s286
          %s288 = sshll.u32 %s284, 4
          %s289 = int_to_ptr.hbm [resolvable:$true] %s288
          %291 = dma.vmem_to_hbm [thread:$0]  %s287, 64, %s289, %s274
        $region44: #{tpu_custom_call.1} parent=39 // pred_fallthru
          _
      $region40: #{tpu_custom_call.1} parent=5 // pred_fallthru
        _
      %p292 = scmp.le.s32.totalorder 2, %s14
      // Predicated region
      $region45: #{tpu_custom_call.1} parent=5 // pred_check
        %p293 = pneg %p292
      $region46: #{tpu_custom_call.1} parent=5 // pred_check_branch
        %295 = sbr.rel (%p293) target = $region48
      $region47: #{tpu_custom_call.1} parent=5 // pred_region
        %s296 = ssub.s32 %s14, 2
        // Predicated region
        $region49: #{tpu_custom_call.1} parent=47 // pred_check
          %p297 = pneg %p153
        $region50: #{tpu_custom_call.1} parent=47 // pred_check_branch
          %299 = sbr.rel (%p297) target = $region52
        $region51: #{tpu_custom_call.1} parent=47 // pred_region
          %s300 = sand.u32 %s138, 1
          %s301 = scalar_lea.sflag [#allocation3], %s300
          %s302 = sand.u32 %s138, 1
          %s303 = smul.addr %s302, 4
          %s304 = scalar_lea.vmem [#allocation2], %s303
          %306 = dma.done %s301, 64
        $region52: #{tpu_custom_call.1} parent=47 // pred_fallthru
          _
      $region48: #{tpu_custom_call.1} parent=5 // pred_fallthru
        _
    $region6: #{tpu_custom_call.1} parent=1 // loop_footer
      %s18 = sadd.s32 1, %s14
    $region7: #{tpu_custom_call.1} parent=1 // loop_footer_branch
      %13 = sbr.rel target = $region3
    $region8: #{tpu_custom_call.1} parent=1 // loop_exit
      _
    %307 = vsyncpa [#allocation3], 1
    %s308 = scalar_lea.sflag [#allocation3], 1
    %309 = vsyncpa %s308, 1

</llo_original>
